<compile_context>
chip_gen: v7x
topology: tpu7x:2x2x1
jax: 0.10.0
libtpu: 0.0.40
codegen_flags: <defaults>
</compile_context>

<pallas_src>
import jax
import jax.numpy as jnp
from jax.experimental import pallas as pl
from jax.experimental.pallas import tpu as pltpu

NEG_SLOPE = 0.01   # nn.LeakyReLU default negative_slope
LANE = 128         # TPU vreg lane width
SUBLANE = 8        # TPU vreg sublane count


def _round_up(n, m):
    return ((n + m - 1) // m) * m


def _leaky_relu(x):
    return jnp.where(x > 0, x, NEG_SLOPE * x)


# ----------------------------------------------------------------------------
# Kernel: one batch tile per grid step; weights/biases resident in VMEM.
# ----------------------------------------------------------------------------
def genus_encoder_kernel(x_ref, w1_ref, b1_ref, w2_ref, b2_ref, w3_ref, b3_ref,
                         o_ref):
    # x_ref: (tb, in_dim) bf16 batch tile.  Weights bf16, biases f32; all
    # accumulation / bias add / LeakyReLU in f32.  Dropout = identity (eval).
    x = x_ref[...]

    # Layer 1: Linear + LeakyReLU.
    h = jnp.dot(x, w1_ref[...], preferred_element_type=jnp.float32)
    h = _leaky_relu(h + b1_ref[...])

    # Layer 2: Linear + LeakyReLU.
    h = jnp.dot(h.astype(w2_ref.dtype), w2_ref[...],
                preferred_element_type=jnp.float32)
    h = _leaky_relu(h + b2_ref[...])

    # Layer 3: Linear (output head).
    out = jnp.dot(h.astype(w3_ref.dtype), w3_ref[...],
                  preferred_element_type=jnp.float32) + b3_ref[...]
    o_ref[...] = out.astype(o_ref.dtype)


# ----------------------------------------------------------------------------
# One-time parameter preparation (outside the per-call path).
# ----------------------------------------------------------------------------
def prepare_params(params, *, compute_dtype=jnp.bfloat16):
    """Cast weights to compute_dtype and zero-pad only the hidden dim to 128.

    params: (w1, b1, w2, b2, w3, b3); weights stored [in, out] (transpose of
    PyTorch's [out, in]), biases [1, out].  Call once; reuse every forward.
    """
    w1, b1, w2, b2, w3, b3 = params
    in_dim, hid_dim = w1.shape
    out_dim = w3.shape[1]
    hid_p = _round_up(hid_dim, LANE)

    def pad2(a, rows, cols, dtype):
        z = jnp.zeros((rows, cols), dtype)
        return z.at[:a.shape[0], :a.shape[1]].set(a.astype(dtype))

    w1p = pad2(w1, in_dim, hid_p, compute_dtype)   # in_dim left unpadded
    w2p = pad2(w2, hid_p, hid_p, compute_dtype)
    w3p = pad2(w3, hid_p, out_dim, compute_dtype)  # out_dim left unpadded
    b1p = pad2(b1, 1, hid_p, jnp.float32)
    b2p = pad2(b2, 1, hid_p, jnp.float32)
    b3p = b3.astype(jnp.float32).reshape(1, out_dim)
    return (w1p, b1p, w2p, b2p, w3p, b3p)


def _pick_tb(batch, block_rows):
    """Batch tile: multiple of 8, >=2 grid tiles when possible, divides batch."""
    cap = max(SUBLANE, _round_up(min(block_rows, batch), SUBLANE))
    if batch > SUBLANE:  # leave at least 2 tiles for megacore sharding (v7x)
        cap = min(cap, _round_up(pl.cdiv(batch, 2), SUBLANE))
    tb = cap
    while tb >= SUBLANE:
        if batch % tb == 0:
            return tb
        tb -= SUBLANE
    return cap  # no multiple-of-8 divisor; last tile handled by zero-padding


def _vmem_limit_bytes(tb, in_dim, hid_p, out_dim, compute_bytes, out_bytes):
    x_bytes = 2 * tb * in_dim * compute_bytes            # double-buffered x
    o_bytes = 2 * tb * out_dim * out_bytes               # double-buffered out
    w_bytes = (in_dim * hid_p + hid_p * hid_p + hid_p * out_dim) * compute_bytes
    b_bytes = (2 * hid_p + out_dim) * 4
    h_bytes = tb * hid_p * 6                              # f32 + bf16 intermediate
    need = x_bytes + o_bytes + w_bytes + b_bytes + h_bytes
    # 2x margin + headroom, clamped to something safe on all generations
    # (v7x physical VMEM is 64 MiB/TensorCore).
    return int(min(max(2 * need + (4 << 20), 16 << 20), 64 << 20))


# ----------------------------------------------------------------------------
# Forward pass.
# ----------------------------------------------------------------------------
def genus_parameter_encoder(x, prepared_params, *, compute_dtype=jnp.bfloat16,
                            out_dtype=jnp.bfloat16, block_rows=512):
    """Fused 3-layer MLP forward (eval-mode dropout = identity).

    x: [batch, input_dim] float array.
    prepared_params: output of prepare_params().
    """
    w1p, b1p, w2p, b2p, w3p, b3p = prepared_params
    batch, in_dim = x.shape
    assert w1p.shape[0] == in_dim, (w1p.shape, in_dim)
    hid_p = w1p.shape[1]
    out_dim = w3p.shape[1]

    tb = _pick_tb(batch, block_rows)
    n_tiles = pl.cdiv(batch, tb)
    batch_p = n_tiles * tb

    xq = x.astype(compute_dtype)
    if batch_p != batch:  # only when no multiple-of-8 tile divides the batch
        xq = jnp.zeros((batch_p, in_dim), compute_dtype).at[:batch].set(xq)

    # Constant-index blocks (weights/biases): resident in VMEM, single-buffered.
    def resident(a):
        return pl.BlockSpec(a.shape, lambda i: (0,) * a.ndim,
                            pipeline_mode=pl.Buffered(1))

    compute_bytes = jnp.dtype(compute_dtype).itemsize
    out_bytes = jnp.dtype(out_dtype).itemsize

    out = pl.pallas_call(
        genus_encoder_kernel,
        out_shape=jax.ShapeDtypeStruct((batch_p, out_dim), out_dtype),
        grid_spec=pl.GridSpec(
            grid=(n_tiles,),
            in_specs=[
                # x: row-tiled batch stream; feature dim = true full dim (legal
                # block dim, no 128-padding needed; MXU pads K internally).
                pl.BlockSpec((tb, in_dim), lambda i: (i, 0)),
                resident(w1p), resident(b1p),
                resident(w2p), resident(b2p),
                resident(w3p), resident(b3p),
            ],
            # out: row-tiled, last dim = true full dim (no lane padding).
            out_specs=pl.BlockSpec((tb, out_dim), lambda i: (i, 0)),
        ),
        compiler_params=pltpu.CompilerParams(
            dimension_semantics=("parallel",),
            vmem_limit_bytes=_vmem_limit_bytes(tb, in_dim, hid_p, out_dim,
                                               compute_bytes, out_bytes),
        ),
    )(xq, w1p, b1p, w2p, b2p, w3p, b3p)

    return out[:batch] if batch_p != batch else out


# ----------------------------------------------------------------------------
# Deterministic init + pure-JAX reference for testing.
# ----------------------------------------------------------------------------
def init_params(key, input_dim, hidden_dim, output_dim):
    """PyTorch-default-style init; weights stored [in, out]."""
    ks = jax.random.split(key, 6)

    def linear(kw, kb, fan_in, fan_out):
        bound = 1.0 / jnp.sqrt(fan_in)
        w = jax.random.uniform(kw, (fan_in, fan_out), jnp.float32, -bound, bound)
        b = jax.random.uniform(kb, (1, fan_out), jnp.float32, -bound, bound)
        return w, b

    w1, b1 = linear(ks[0], ks[1], input_dim, hidden_dim)
    w2, b2 = linear(ks[2], ks[3], hidden_dim, hidden_dim)
    w3, b3 = linear(ks[4], ks[5], hidden_dim, output_dim)
    return (w1, b1, w2, b2, w3, b3)


def reference(x, params):
    """Pure-JAX f32 reference of the eval-mode forward pass."""
    w1, b1, w2, b2, w3, b3 = params
    h = _leaky_relu(x @ w1 + b1)
    h = _leaky_relu(h @ w2 + b2)
    return h @ w3 + b3


if __name__ == "__main__":
    key = jax.random.PRNGKey(0)
    k_x, k_p = jax.random.split(key)

    # Small shapes consistent with the module; block_rows=8 -> 4 grid tiles so
    # the pipelined / multi-tile path is exercised.
    batch, input_dim, hidden_dim, output_dim = 32, 16, 32, 8
    x = jax.random.normal(k_x, (batch, input_dim), jnp.float32)
    params = init_params(k_p, input_dim, hidden_dim, output_dim)

    prepared = prepare_params(params)  # one-time pad/cast, outside per-call path

    out = genus_parameter_encoder(x, prepared, block_rows=8)
    out = jax.block_until_ready(out)

    ref = reference(x, params)
    assert out.shape == (batch, output_dim), out.shape
    # bf16 storage / bf16 output with f32 accumulation: compare against the
    # f32 reference with a bf16-appropriate tolerance.
    assert jnp.allclose(out.astype(jnp.float32), ref, atol=3e-2, rtol=3e-2), \
        "mismatch vs reference"

    print("KERNEL_OK")
</pallas_src>

<mosaic_0001>
module attributes {stable_mosaic.version = 11 : i64} {
  func.func @genus_encoder_kernel(%arg0: i32, %arg1: memref<8x16xbf16, #tpu.memory_space<vmem>>, %arg2: memref<16x128xbf16, #tpu.memory_space<vmem>>, %arg3: memref<1x128xf32, #tpu.memory_space<vmem>>, %arg4: memref<128x128xbf16, #tpu.memory_space<vmem>>, %arg5: memref<1x128xf32, #tpu.memory_space<vmem>>, %arg6: memref<128x8xbf16, #tpu.memory_space<vmem>>, %arg7: memref<1x8xf32, #tpu.memory_space<vmem>>, %arg8: memref<8x8xbf16, #tpu.memory_space<vmem>>) attributes {dimension_semantics = [#tpu.dimension_semantics<parallel>], iteration_bounds = array<i64: 4>, scalar_prefetch = 0 : i64, scratch_operands = 0 : i64, tpu.core_type = #tpu.core_type<tc>, window_params = [{transform_indices = @transform_0, window_bounds = array<i64: 8, 16>}, {pipeline_mode = #tpu.pipeline_mode<synchronous>, transform_indices = @transform_1, window_bounds = array<i64: 16, 128>}, {pipeline_mode = #tpu.pipeline_mode<synchronous>, transform_indices = @transform_2, window_bounds = array<i64: 1, 128>}, {pipeline_mode = #tpu.pipeline_mode<synchronous>, transform_indices = @transform_3, window_bounds = array<i64: 128, 128>}, {pipeline_mode = #tpu.pipeline_mode<synchronous>, transform_indices = @transform_4, window_bounds = array<i64: 1, 128>}, {pipeline_mode = #tpu.pipeline_mode<synchronous>, transform_indices = @transform_5, window_bounds = array<i64: 128, 8>}, {pipeline_mode = #tpu.pipeline_mode<synchronous>, transform_indices = @transform_6, window_bounds = array<i64: 1, 8>}, {transform_indices = @transform_7, window_bounds = array<i64: 8, 8>}]} {
    %c0 = arith.constant 0 : index
    %c0_0 = arith.constant 0 : index
    %0 = vector.load %arg1[%c0, %c0_0] : memref<8x16xbf16, #tpu.memory_space<vmem>>, vector<8x16xbf16>
    %c0_1 = arith.constant 0 : index
    %c0_2 = arith.constant 0 : index
    %1 = vector.load %arg2[%c0_1, %c0_2] : memref<16x128xbf16, #tpu.memory_space<vmem>>, vector<16x128xbf16>
    %cst = arith.constant dense<0.000000e+00> : vector<8x128xf32>
    %2 = tpu.matmul %0, %1, %cst {dimension_numbers = #tpu.dot_dimension_numbers<[1], [0], [0], [1], [0, 0, 1, 1], [], []>} : vector<8x16xbf16>, vector<16x128xbf16>, vector<8x128xf32> -> vector<8x128xf32>
    %c0_3 = arith.constant 0 : index
    %c0_4 = arith.constant 0 : index
    %3 = vector.load %arg3[%c0_3, %c0_4] : memref<1x128xf32, #tpu.memory_space<vmem>>, vector<1x128xf32>
    %4 = vector.broadcast %3 : vector<1x128xf32> to vector<8x128xf32>
    %5 = arith.addf %2, %4 : vector<8x128xf32>
    %cst_5 = arith.constant 0.000000e+00 : f32
    %6 = vector.broadcast %cst_5 : f32 to vector<8x128xf32>
    %7 = arith.cmpf ogt, %5, %6 : vector<8x128xf32>
    %cst_6 = arith.constant 0.00999999977 : f32
    %8 = vector.broadcast %cst_6 : f32 to vector<8x128xf32>
    %9 = arith.mulf %8, %5 : vector<8x128xf32>
    %10 = arith.select %7, %5, %9 : vector<8x128xi1>, vector<8x128xf32>
    %11 = arith.truncf %10 : vector<8x128xf32> to vector<8x128xbf16>
    %c0_7 = arith.constant 0 : index
    %c0_8 = arith.constant 0 : index
    %12 = vector.load %arg4[%c0_7, %c0_8] : memref<128x128xbf16, #tpu.memory_space<vmem>>, vector<128x128xbf16>
    %cst_9 = arith.constant dense<0.000000e+00> : vector<8x128xf32>
    %13 = tpu.matmul %11, %12, %cst_9 {dimension_numbers = #tpu.dot_dimension_numbers<[1], [0], [0], [1], [0, 0, 1, 1], [], []>} : vector<8x128xbf16>, vector<128x128xbf16>, vector<8x128xf32> -> vector<8x128xf32>
    %c0_10 = arith.constant 0 : index
    %c0_11 = arith.constant 0 : index
    %14 = vector.load %arg5[%c0_10, %c0_11] : memref<1x128xf32, #tpu.memory_space<vmem>>, vector<1x128xf32>
    %15 = vector.broadcast %14 : vector<1x128xf32> to vector<8x128xf32>
    %16 = arith.addf %13, %15 : vector<8x128xf32>
    %cst_12 = arith.constant 0.000000e+00 : f32
    %17 = vector.broadcast %cst_12 : f32 to vector<8x128xf32>
    %18 = arith.cmpf ogt, %16, %17 : vector<8x128xf32>
    %cst_13 = arith.constant 0.00999999977 : f32
    %19 = vector.broadcast %cst_13 : f32 to vector<8x128xf32>
    %20 = arith.mulf %19, %16 : vector<8x128xf32>
    %21 = arith.select %18, %16, %20 : vector<8x128xi1>, vector<8x128xf32>
    %22 = arith.truncf %21 : vector<8x128xf32> to vector<8x128xbf16>
    %c0_14 = arith.constant 0 : index
    %c0_15 = arith.constant 0 : index
    %23 = vector.load %arg6[%c0_14, %c0_15] : memref<128x8xbf16, #tpu.memory_space<vmem>>, vector<128x8xbf16>
    %cst_16 = arith.constant dense<0.000000e+00> : vector<8x8xf32>
    %24 = tpu.matmul %22, %23, %cst_16 {dimension_numbers = #tpu.dot_dimension_numbers<[1], [0], [0], [1], [0, 0, 1, 1], [], []>} : vector<8x128xbf16>, vector<128x8xbf16>, vector<8x8xf32> -> vector<8x8xf32>
    %c0_17 = arith.constant 0 : index
    %c0_18 = arith.constant 0 : index
    %25 = vector.load %arg7[%c0_17, %c0_18] : memref<1x8xf32, #tpu.memory_space<vmem>>, vector<1x8xf32>
    %26 = vector.broadcast %25 : vector<1x8xf32> to vector<8x8xf32>
    %27 = arith.addf %24, %26 : vector<8x8xf32>
    %28 = arith.truncf %27 : vector<8x8xf32> to vector<8x8xbf16>
    %c0_19 = arith.constant 0 : index
    %c0_20 = arith.constant 0 : index
    %29 = vector.load %arg8[%c0_19, %c0_20] : memref<8x8xbf16, #tpu.memory_space<vmem>>, vector<8x8xbf16>
    tpu.vector_store %arg8[%c0_19, %c0_20], %28 {strides = array<i32>} : memref<8x8xbf16, #tpu.memory_space<vmem>>, vector<8x8xbf16>,
    return
  }
  func.func @transform_0(%arg0: i32) -> (i32, i32) {
    %c0_i32 = arith.constant 0 : i32
    %c0_i32_0 = arith.constant 0 : i32
    return %arg0, %c0_i32 : i32, i32
  }
  func.func @transform_1(%arg0: i32) -> (i32, i32) {
    %c0_i32 = arith.constant 0 : i32
    %c0_i32_0 = arith.constant 0 : i32
    %c0_i32_1 = arith.constant 0 : i32
    return %c0_i32, %c0_i32_0 : i32, i32
  }
  func.func @transform_2(%arg0: i32) -> (i32, i32) {
    %c0_i32 = arith.constant 0 : i32
    %c0_i32_0 = arith.constant 0 : i32
    %c0_i32_1 = arith.constant 0 : i32
    return %c0_i32, %c0_i32_0 : i32, i32
  }
  func.func @transform_3(%arg0: i32) -> (i32, i32) {
    %c0_i32 = arith.constant 0 : i32
    %c0_i32_0 = arith.constant 0 : i32
    %c0_i32_1 = arith.constant 0 : i32
    return %c0_i32, %c0_i32_0 : i32, i32
  }
  func.func @transform_4(%arg0: i32) -> (i32, i32) {
    %c0_i32 = arith.constant 0 : i32
    %c0_i32_0 = arith.constant 0 : i32
    %c0_i32_1 = arith.constant 0 : i32
    return %c0_i32, %c0_i32_0 : i32, i32
  }
  func.func @transform_5(%arg0: i32) -> (i32, i32) {
    %c0_i32 = arith.constant 0 : i32
    %c0_i32_0 = arith.constant 0 : i32
    %c0_i32_1 = arith.constant 0 : i32
    return %c0_i32, %c0_i32_0 : i32, i32
  }
  func.func @transform_6(%arg0: i32) -> (i32, i32) {
    %c0_i32 = arith.constant 0 : i32
    %c0_i32_0 = arith.constant 0 : i32
    %c0_i32_1 = arith.constant 0 : i32
    return %c0_i32, %c0_i32_0 : i32, i32
  }
  func.func @transform_7(%arg0: i32) -> (i32, i32) {
    %c0_i32 = arith.constant 0 : i32
    %c0_i32_0 = arith.constant 0 : i32
    return %arg0, %c0_i32 : i32, i32
  }
}

</mosaic_0001>

<llo_original>
// kernel: tpu_custom_call.1
$region0: #{tpu_custom_call.1}
  #allocation0 [shape = 'u32[]', space=smem, size = 0x4, offset = 0x4, fixed_abs, tag = 'smem constant byte address 0x4 - core index']
  #allocation1 [shape = 'u32[144,128]{1,0:T(1,128)}', space=vmem, size = 0x12000, scoped, tag = 'internal scratch']
  %s0 = inlined_call_operand.vmem [shape: bf16[32,16], index: 0, kind: input, shape index: {}]
  %s1 = inlined_call_operand.vmem [shape: bf16[16,128], index: 1, kind: input, shape index: {}]
  %s2 = inlined_call_operand.vmem [shape: f32[1,128], index: 2, kind: input, shape index: {}]
  %s3 = inlined_call_operand.vmem [shape: bf16[128,128], index: 3, kind: input, shape index: {}]
  %s4 = inlined_call_operand.vmem [shape: f32[1,128], index: 4, kind: input, shape index: {}]
  %s5 = inlined_call_operand.vmem [shape: bf16[128,8], index: 5, kind: input, shape index: {}]
  %s6 = inlined_call_operand.vmem [shape: f32[1,8], index: 6, kind: input, shape index: {}]
  %s7 = inlined_call_operand.vmem [shape: bf16[32,8], index: 7, kind: output, shape index: {}]
  %s8 = sld [smem:[#allocation0]]
  $region61: #{tpu_custom_call.1} parent=0
    _
  %s10 = ssub.s32 1, %s8
  %s11 = scalar_select 0, %s10, %s8
  loop: start=0, step=1, limit=6
  $region2: #{tpu_custom_call.1} parent=0 // loop_pre_header
    _
  $region3: #{tpu_custom_call.1} parent=0 // loop_header
    %s13 = sphi 0, %s17
    %p14 = scmp.ge.s32.totalorder %s13, 6
    %s23 = sphi 0, %s25
    %s26 = sphi 0, %s23
    %s27 = sphi 0, %s26
    %s43 = sphi 0, %s27
    %s47 = sphi 0, %s47
    %s49 = sphi 0, %s47
    %s50 = sphi 0, %s49
    %s64 = sphi 0, %s50
    %s68 = sphi 0, %s68
    %s70 = sphi 0, %s68
    %s71 = sphi 0, %s70
    %s85 = sphi 0, %s71
    %s89 = sphi 0, %s89
    %s91 = sphi 0, %s89
    %s92 = sphi 0, %s91
    %s106 = sphi 0, %s92
    %s110 = sphi 0, %s110
    %s112 = sphi 0, %s110
    %s113 = sphi 0, %s112
    %s127 = sphi 0, %s113
    %s131 = sphi 0, %s131
    %s133 = sphi 0, %s131
    %s134 = sphi 0, %s133
    %s148 = sphi 0, %s134
    %s152 = sphi 0, %s152
    %s154 = sphi 0, %s152
    %s155 = sphi 0, %s154
    %s169 = sphi 0, %s155
    %s175 = sphi 0, %s177
    %s178 = sphi 0, %s175
    %s179 = sphi 0, %s178
    %s195 = sphi 0, %s179
  $region4: #{tpu_custom_call.1} parent=0 // loop_header_branch
    %16 = sbr.rel (%p14) target = $region8
  $region5: #{tpu_custom_call.1} parent=0 // loop_body
    %s18 = ssub.s32 %s13, 1
    %s19 = ssub.s32 %s13, 2
    %s20 = sadd.s32 %s13, 1
    %s21 = ssub.s32 %s13, %s20
    %p22 = scmp.eq.s32.totalorder %s21, 0
    %s24 = sadd.s32 %s23, 1
    %s25 = scalar_select %p22, %s23, %s24
    %p28 = pneg %p22
    %p29 = scmp.eq.s32.totalorder %s13, 3
    %p30 = por %p28, %p29
    %p31 = scmp.ne.s32.totalorder %s23, %s26
    %p32 = scmp.eq.s32.totalorder %s13, 0
    %p33 = por %p31, %p32
    %p34 = scmp.ne.s32.totalorder %s23, %s26
    %p35 = scmp.eq.s32.totalorder %s18, 3
    %p36 = por %p34, %p35
    %p37 = scmp.ne.s32.totalorder %s26, %s27
    %p38 = scmp.eq.s32.totalorder %s18, 0
    %p39 = por %p37, %p38
    %p40 = scmp.ne.s32.totalorder %s26, %s27
    %p41 = scmp.eq.s32.totalorder %s19, 3
    %p42 = por %p40, %p41
    %p44 = scmp.ne.s32.totalorder %s27, %s43
    %p45 = scmp.eq.s32.totalorder %s19, 0
    %p46 = por %p44, %p45
    %s48 = sadd.s32 %s47, 1
    %p51 = scmp.eq.s32.totalorder %s13, 3
    %p52 = scmp.ne.s32.totalorder %s47, %s49
    %p53 = scmp.eq.s32.totalorder %s13, 0
    %p54 = por %p52, %p53
    %p55 = scmp.ne.s32.totalorder %s47, %s49
    %p56 = scmp.eq.s32.totalorder %s18, 3
    %p57 = por %p55, %p56
    %p58 = scmp.ne.s32.totalorder %s49, %s50
    %p59 = scmp.eq.s32.totalorder %s18, 0
    %p60 = por %p58, %p59
    %p61 = scmp.ne.s32.totalorder %s49, %s50
    %p62 = scmp.eq.s32.totalorder %s19, 3
    %p63 = por %p61, %p62
    %p65 = scmp.ne.s32.totalorder %s50, %s64
    %p66 = scmp.eq.s32.totalorder %s19, 0
    %p67 = por %p65, %p66
    %s69 = sadd.s32 %s68, 1
    %p72 = scmp.eq.s32.totalorder %s13, 3
    %p73 = scmp.ne.s32.totalorder %s68, %s70
    %p74 = scmp.eq.s32.totalorder %s13, 0
    %p75 = por %p73, %p74
    %p76 = scmp.ne.s32.totalorder %s68, %s70
    %p77 = scmp.eq.s32.totalorder %s18, 3
    %p78 = por %p76, %p77
    %p79 = scmp.ne.s32.totalorder %s70, %s71
    %p80 = scmp.eq.s32.totalorder %s18, 0
    %p81 = por %p79, %p80
    %p82 = scmp.ne.s32.totalorder %s70, %s71
    %p83 = scmp.eq.s32.totalorder %s19, 3
    %p84 = por %p82, %p83
    %p86 = scmp.ne.s32.totalorder %s71, %s85
    %p87 = scmp.eq.s32.totalorder %s19, 0
    %p88 = por %p86, %p87
    %s90 = sadd.s32 %s89, 1
    %p93 = scmp.eq.s32.totalorder %s13, 3
    %p94 = scmp.ne.s32.totalorder %s89, %s91
    %p95 = scmp.eq.s32.totalorder %s13, 0
    %p96 = por %p94, %p95
    %p97 = scmp.ne.s32.totalorder %s89, %s91
    %p98 = scmp.eq.s32.totalorder %s18, 3
    %p99 = por %p97, %p98
    %p100 = scmp.ne.s32.totalorder %s91, %s92
    %p101 = scmp.eq.s32.totalorder %s18, 0
    %p102 = por %p100, %p101
    %p103 = scmp.ne.s32.totalorder %s91, %s92
    %p104 = scmp.eq.s32.totalorder %s19, 3
    %p105 = por %p103, %p104
    %p107 = scmp.ne.s32.totalorder %s92, %s106
    %p108 = scmp.eq.s32.totalorder %s19, 0
    %p109 = por %p107, %p108
    %s111 = sadd.s32 %s110, 1
    %p114 = scmp.eq.s32.totalorder %s13, 3
    %p115 = scmp.ne.s32.totalorder %s110, %s112
    %p116 = scmp.eq.s32.totalorder %s13, 0
    %p117 = por %p115, %p116
    %p118 = scmp.ne.s32.totalorder %s110, %s112
    %p119 = scmp.eq.s32.totalorder %s18, 3
    %p120 = por %p118, %p119
    %p121 = scmp.ne.s32.totalorder %s112, %s113
    %p122 = scmp.eq.s32.totalorder %s18, 0
    %p123 = por %p121, %p122
    %p124 = scmp.ne.s32.totalorder %s112, %s113
    %p125 = scmp.eq.s32.totalorder %s19, 3
    %p126 = por %p124, %p125
    %p128 = scmp.ne.s32.totalorder %s113, %s127
    %p129 = scmp.eq.s32.totalorder %s19, 0
    %p130 = por %p128, %p129
    %s132 = sadd.s32 %s131, 1
    %p135 = scmp.eq.s32.totalorder %s13, 3
    %p136 = scmp.ne.s32.totalorder %s131, %s133
    %p137 = scmp.eq.s32.totalorder %s13, 0
    %p138 = por %p136, %p137
    %p139 = scmp.ne.s32.totalorder %s131, %s133
    %p140 = scmp.eq.s32.totalorder %s18, 3
    %p141 = por %p139, %p140
    %p142 = scmp.ne.s32.totalorder %s133, %s134
    %p143 = scmp.eq.s32.totalorder %s18, 0
    %p144 = por %p142, %p143
    %p145 = scmp.ne.s32.totalorder %s133, %s134
    %p146 = scmp.eq.s32.totalorder %s19, 3
    %p147 = por %p145, %p146
    %p149 = scmp.ne.s32.totalorder %s134, %s148
    %p150 = scmp.eq.s32.totalorder %s19, 0
    %p151 = por %p149, %p150
    %s153 = sadd.s32 %s152, 1
    %p156 = scmp.eq.s32.totalorder %s13, 3
    %p157 = scmp.ne.s32.totalorder %s152, %s154
    %p158 = scmp.eq.s32.totalorder %s13, 0
    %p159 = por %p157, %p158
    %p160 = scmp.ne.s32.totalorder %s152, %s154
    %p161 = scmp.eq.s32.totalorder %s18, 3
    %p162 = por %p160, %p161
    %p163 = scmp.ne.s32.totalorder %s154, %s155
    %p164 = scmp.eq.s32.totalorder %s18, 0
    %p165 = por %p163, %p164
    %p166 = scmp.ne.s32.totalorder %s154, %s155
    %p167 = scmp.eq.s32.totalorder %s19, 3
    %p168 = por %p166, %p167
    %p170 = scmp.ne.s32.totalorder %s155, %s169
    %p171 = scmp.eq.s32.totalorder %s19, 0
    %p172 = por %p170, %p171
    %s173 = ssub.s32 %s13, %s20
    %p174 = scmp.eq.s32.totalorder %s173, 0
    %s176 = sadd.s32 %s175, 1
    %s177 = scalar_select %p174, %s175, %s176
    %p180 = pneg %p174
    %p181 = scmp.eq.s32.totalorder %s13, 3
    %p182 = por %p180, %p181
    %p183 = scmp.ne.s32.totalorder %s175, %s178
    %p184 = scmp.eq.s32.totalorder %s13, 0
    %p185 = por %p183, %p184
    %p186 = scmp.ne.s32.totalorder %s175, %s178
    %p187 = scmp.eq.s32.totalorder %s18, 3
    %p188 = por %p186, %p187
    %p189 = scmp.ne.s32.totalorder %s178, %s179
    %p190 = scmp.eq.s32.totalorder %s18, 0
    %p191 = por %p189, %p190
    %p192 = scmp.ne.s32.totalorder %s178, %s179
    %p193 = scmp.eq.s32.totalorder %s19, 3
    %p194 = por %p192, %p193
    %p196 = scmp.ne.s32.totalorder %s179, %s195
    %p197 = scmp.eq.s32.totalorder %s19, 0
    %p198 = por %p196, %p197
    %p199 = scmp.le.s32.totalorder 1, %s13
    %p200 = scmp.lt.s32.totalorder %s13, 5
    %p201 = pnand %p199, %p200
    %p202 = pneg %p201
    // Predicated region
    $region9: #{tpu_custom_call.1} parent=5 // pred_check
      _
    $region10: #{tpu_custom_call.1} parent=5 // pred_check_branch
      %204 = sbr.rel (%p201) target = $region12
    $region11: #{tpu_custom_call.1} parent=5 // pred_region
      %s205 = ssub.s32 %s13, 1
      // Predicated region
      $region13: #{tpu_custom_call.1} parent=11 // pred_check
        %p206 = pneg %p60
      $region14: #{tpu_custom_call.1} parent=11 // pred_check_branch
        %208 = sbr.rel (%p206) target = $region16
      $region15: #{tpu_custom_call.1} parent=11 // pred_region
        _
      $region16: #{tpu_custom_call.1} parent=11 // pred_fallthru
        _
      // Predicated region
      $region17: #{tpu_custom_call.1} parent=11 // pred_check
        %p209 = pneg %p81
      $region18: #{tpu_custom_call.1} parent=11 // pred_check_branch
        %211 = sbr.rel (%p209) target = $region20
      $region19: #{tpu_custom_call.1} parent=11 // pred_region
        _
      $region20: #{tpu_custom_call.1} parent=11 // pred_fallthru
        _
      // Predicated region
      $region21: #{tpu_custom_call.1} parent=11 // pred_check
        %p212 = pneg %p102
      $region22: #{tpu_custom_call.1} parent=11 // pred_check_branch
        %214 = sbr.rel (%p212) target = $region24
      $region23: #{tpu_custom_call.1} parent=11 // pred_region
        _
      $region24: #{tpu_custom_call.1} parent=11 // pred_fallthru
        _
      // Predicated region
      $region25: #{tpu_custom_call.1} parent=11 // pred_check
        %p215 = pneg %p123
      $region26: #{tpu_custom_call.1} parent=11 // pred_check_branch
        %217 = sbr.rel (%p215) target = $region28
      $region27: #{tpu_custom_call.1} parent=11 // pred_region
        _
      $region28: #{tpu_custom_call.1} parent=11 // pred_fallthru
        _
      // Predicated region
      $region29: #{tpu_custom_call.1} parent=11 // pred_check
        %p218 = pneg %p144
      $region30: #{tpu_custom_call.1} parent=11 // pred_check_branch
        %220 = sbr.rel (%p218) target = $region32
      $region31: #{tpu_custom_call.1} parent=11 // pred_region
        _
      $region32: #{tpu_custom_call.1} parent=11 // pred_fallthru
        _
      // Predicated region
      $region33: #{tpu_custom_call.1} parent=11 // pred_check
        %p221 = pneg %p165
      $region34: #{tpu_custom_call.1} parent=11 // pred_check_branch
        %223 = sbr.rel (%p221) target = $region36
      $region35: #{tpu_custom_call.1} parent=11 // pred_region
        _
      $region36: #{tpu_custom_call.1} parent=11 // pred_fallthru
        _
    $region12: #{tpu_custom_call.1} parent=5 // pred_fallthru
      _
    %p224 = scmp.lt.s32.totalorder %s13, 4
    // Predicated region
    $region37: #{tpu_custom_call.1} parent=5 // pred_check
      %p225 = pneg %p224
    $region38: #{tpu_custom_call.1} parent=5 // pred_check_branch
      %227 = sbr.rel (%p225) target = $region40
    $region39: #{tpu_custom_call.1} parent=5 // pred_region
      // Predicated region
      $region41: #{tpu_custom_call.1} parent=39 // pred_check
        %p228 = pneg %p33
      $region42: #{tpu_custom_call.1} parent=39 // pred_check_branch
        %230 = sbr.rel (%p228) target = $region44
      $region43: #{tpu_custom_call.1} parent=39 // pred_region
        %p231 = scmp.lt.s32.totalorder %s13, 3
        %s232 = scalar_select %p231, %s13, 3
        %s233 = smul.addr %s232, 4
        %s234 = scalar_lea.vmem %s0, %s233
      $region44: #{tpu_custom_call.1} parent=39 // pred_fallthru
        _
    $region40: #{tpu_custom_call.1} parent=5 // pred_fallthru
      _
    %p235 = scmp.le.s32.totalorder 1, %s13
    %p236 = scmp.lt.s32.totalorder %s13, 5
    %p237 = pnand %p235, %p236
    %p238 = pneg %p237
    // Predicated region
    $region45: #{tpu_custom_call.1} parent=5 // pred_check
      _
    $region46: #{tpu_custom_call.1} parent=5 // pred_check_branch
      %240 = sbr.rel (%p237) target = $region48
    $region47: #{tpu_custom_call.1} parent=5 // pred_region
      %s241 = ssub.s32 %s13, 1
      %p242 = scmp.lt.s32.totalorder %s18, 3
      %s243 = scalar_select %p242, %s18, 3
      %s244 = smul.addr %s243, 4
      %s245 = scalar_lea.vmem %s0, %s244
      %p246 = pneg %p39
      %p247 = pneg %p36
      %p248 = pneg %p60
      %p249 = pneg %p57
      %p250 = pneg %p81
      %p251 = pneg %p78
      %p252 = pneg %p102
      %p253 = pneg %p99
      %p254 = pneg %p123
      %p255 = pneg %p120
      %p256 = pneg %p144
      %p257 = pneg %p141
      %p258 = pneg %p165
      %p259 = pneg %p162
      %p260 = pneg %p191
      %p261 = pneg %p188
      %p262 = scmp.lt.s32.totalorder %s18, 3
      %s263 = scalar_select %p262, %s18, 3
      %s264 = smul.addr %s263, 4
      %s265 = scalar_lea.vmem %s7, %s264
      %p266 = scmp.lt.s32.totalorder %s18, 3
      %s267 = scalar_select %p266, %s18, 3
      %s268 = smul.addr %s267, 4
      %s269 = scalar_lea.vmem %s0, %s268
      %p270 = scmp.lt.s32.totalorder %s18, 3
      %s271 = scalar_select %p270, %s18, 3
      %s272 = smul.addr %s271, 4
      %s273 = scalar_lea.vmem %s7, %s272
      %v275 = vld [vmem:[%s269] sm:$0xf]
      %v276 = vld [vmem:[%s1] sm:$0xf]
      %v277 = vld [vmem:[%s1 + $0x4] sm:$0xf]
      %v278 = vld [vmem:[%s2] sm:$0x1]
      %v280 = vlaneseq
      %v281 = vshrl.u32 %v280, 7
      %v282 = vsub.s32 0, %v281
      %v283 = vrot.slane %v278, %v282
      %v287 = vunpack.c.l.b16 %v276
      %v288 = vunpack.c.l.b16 %v277
      %v289 = vpack.c.b16 %v288, %v287
      %vm291 = vcmask 130048
      %v293 = vsel %vm291, %v275, 0
      %295 = vmatprep.subr.bf16.mxu0 0
      %296 = vmatpush1.bf16.msra.mxu0 %v289
      %297 = vmatprep.subr.bf16.mxu0 0
      %298 = vmatpush1.bf16.msra.mxu0 0
      %299 = vmatprep.subr.bf16.mxu0 0
      %300 = vmatpush1.bf16.msra.mxu0 0
      %301 = vmatprep.subr.bf16.mxu0 0
      %302 = vmatpush1.bf16.msra.mxu0 0
      %303 = vmatprep.subr.bf16.mxu0 0
      %304 = vmatpush1.bf16.msra.mxu0 0
      %305 = vmatprep.subr.bf16.mxu0 0
      %306 = vmatpush1.bf16.msra.mxu0 0
      %307 = vmatprep.subr.bf16.mxu0 0
      %308 = vmatpush1.bf16.msra.mxu0 0
      %309 = vmatprep.subr.bf16.mxu0 0
      %310 = vmatpush1.bf16.msra.mxu0 0
      %311 = vmatprep.subr.bf16.mxu0 0
      %312 = vmatpush1.bf16.msra.mxu0 0
      %313 = vmatprep.subr.bf16.mxu0 0
      %314 = vmatpush1.bf16.msra.mxu0 0
      %315 = vmatprep.subr.bf16.mxu0 0
      %316 = vmatpush1.bf16.msra.mxu0 0
      %317 = vmatprep.subr.bf16.mxu0 0
      %318 = vmatpush1.bf16.msra.mxu0 0
      %319 = vmatprep.subr.bf16.mxu0 0
      %320 = vmatpush1.bf16.msra.mxu0 0
      %321 = vmatprep.subr.bf16.mxu0 0
      %322 = vmatpush1.bf16.msra.mxu0 0
      %323 = vmatprep.subr.bf16.mxu0 0
      %324 = vmatpush1.bf16.msra.mxu0 0
      %325 = vmatprep.subr.bf16.mxu0 0
      %326 = vmatpush1.bf16.msra.mxu0 0
      %327 = vmatprep.mubr.bf16.mxu0 0
      %328 = vmatmul.mubr.bf16.gmra.mrb[0].mxu0 %v293
      %v329 = vpop.f32.mrb[0].mxu0
      %v330 = vadd.f32 %v283, %v329
      %v331 = vpop.f32.mrb[0].mxu0
      %v332 = vpop.f32.mrb[0].mxu0
      %v333 = vpop.f32.mrb[0].mxu0
      %334 = vdwg.mxu0
      %vm335 = vcmp.gt.f32.partialorder %v330, 0.0
      %v336 = vmul.f32 %v330, 0.01
      %v337 = vsel %vm335, %v330, %v336
      %v338 = vpack.c.bf16 %v337, %v337
      %v339 = vld [vmem:[%s3] sm:$0xf]
      %v340 = vld [vmem:[%s3 + $0x4] sm:$0xf]
      %v341 = vld [vmem:[%s3 + $0x8] sm:$0xf]
      %v342 = vld [vmem:[%s3 + $0xc] sm:$0xf]
      %v343 = vld [vmem:[%s3 + $0x10] sm:$0xf]
      %v344 = vld [vmem:[%s3 + $0x14] sm:$0xf]
      %v345 = vld [vmem:[%s3 + $0x18] sm:$0xf]
      %v346 = vld [vmem:[%s3 + $0x1c] sm:$0xf]
      %v347 = vld [vmem:[%s3 + $0x20] sm:$0xf]
      %v348 = vld [vmem:[%s3 + $0x24] sm:$0xf]
      %v349 = vld [vmem:[%s3 + $0x28] sm:$0xf]
      %v350 = vld [vmem:[%s3 + $0x2c] sm:$0xf]
      %v351 = vld [vmem:[%s3 + $0x30] sm:$0xf]
      %v352 = vld [vmem:[%s3 + $0x34] sm:$0xf]
      %v353 = vld [vmem:[%s3 + $0x38] sm:$0xf]
      %v354 = vld [vmem:[%s3 + $0x3c] sm:$0xf]
      %v355 = vld [vmem:[%s4] sm:$0x1]
      %v357 = vlaneseq
      %v358 = vshrl.u32 %v357, 7
      %v359 = vsub.s32 0, %v358
      %v360 = vrot.slane %v355, %v359
      %v378 = vunpack.c.l.b16 %v339
      %v379 = vunpack.c.l.b16 %v340
      %v380 = vunpack.c.l.b16 %v341
      %v381 = vunpack.c.l.b16 %v342
      %v382 = vunpack.c.l.b16 %v343
      %v383 = vunpack.c.l.b16 %v344
      %v384 = vunpack.c.l.b16 %v345
      %v385 = vunpack.c.l.b16 %v346
      %v386 = vunpack.c.l.b16 %v347
      %v387 = vunpack.c.l.b16 %v348
      %v388 = vunpack.c.l.b16 %v349
      %v389 = vunpack.c.l.b16 %v350
      %v390 = vunpack.c.l.b16 %v351
      %v391 = vunpack.c.l.b16 %v352
      %v392 = vunpack.c.l.b16 %v353
      %v393 = vunpack.c.l.b16 %v354
      %v394 = vpack.c.b16 %v379, %v378
      %v395 = vpack.c.b16 %v381, %v380
      %v396 = vpack.c.b16 %v383, %v382
      %v397 = vpack.c.b16 %v385, %v384
      %v398 = vpack.c.b16 %v387, %v386
      %v399 = vpack.c.b16 %v389, %v388
      %v400 = vpack.c.b16 %v391, %v390
      %v401 = vpack.c.b16 %v393, %v392
      %410 = vmatprep.subr.bf16.mxu0 0
      %411 = vmatpush1.bf16.msra.mxu0 %v394
      %412 = vmatprep.subr.bf16.mxu0 0
      %413 = vmatpush1.bf16.msra.mxu0 %v395
      %414 = vmatprep.subr.bf16.mxu0 0
      %415 = vmatpush1.bf16.msra.mxu0 %v396
      %416 = vmatprep.subr.bf16.mxu0 0
      %417 = vmatpush1.bf16.msra.mxu0 %v397
      %418 = vmatprep.subr.bf16.mxu0 0
      %419 = vmatpush1.bf16.msra.mxu0 %v398
      %420 = vmatprep.subr.bf16.mxu0 0
      %421 = vmatpush1.bf16.msra.mxu0 %v399
      %422 = vmatprep.subr.bf16.mxu0 0
      %423 = vmatpush1.bf16.msra.mxu0 %v400
      %424 = vmatprep.subr.bf16.mxu0 0
      %425 = vmatpush1.bf16.msra.mxu0 %v401
      %426 = vmatprep.subr.bf16.mxu0 0
      %427 = vmatpush1.bf16.msra.mxu0 0
      %428 = vmatprep.subr.bf16.mxu0 0
      %429 = vmatpush1.bf16.msra.mxu0 0
      %430 = vmatprep.subr.bf16.mxu0 0
      %431 = vmatpush1.bf16.msra.mxu0 0
      %432 = vmatprep.subr.bf16.mxu0 0
      %433 = vmatpush1.bf16.msra.mxu0 0
      %434 = vmatprep.subr.bf16.mxu0 0
      %435 = vmatpush1.bf16.msra.mxu0 0
      %436 = vmatprep.subr.bf16.mxu0 0
      %437 = vmatpush1.bf16.msra.mxu0 0
      %438 = vmatprep.subr.bf16.mxu0 0
      %439 = vmatpush1.bf16.msra.mxu0 0
      %440 = vmatprep.subr.bf16.mxu0 0
      %441 = vmatpush1.bf16.msra.mxu0 0
      %442 = vmatprep.mubr.bf16.mxu0 0
      %443 = vmatmul.mubr.bf16.gmra.mrb[0].mxu0 %v338
      %v444 = vpop.f32.mrb[0].mxu0
      %v445 = vadd.f32 %v360, %v444
      %v446 = vpop.f32.mrb[0].mxu0
      %v447 = vpop.f32.mrb[0].mxu0
      %v448 = vpop.f32.mrb[0].mxu0
      %449 = vdwg.mxu0
      %vm450 = vcmp.gt.f32.partialorder %v445, 0.0
      %v451 = vmul.f32 %v445, 0.01
      %v452 = vsel %vm450, %v445, %v451
      %v453 = vpack.c.bf16 %v452, %v452
      %v454 = vld [vmem:[%s5] sm:$0xf]
      %v455 = vld [vmem:[%s5 + $0x4] sm:$0xf]
      %v456 = vld [vmem:[%s5 + $0x8] sm:$0xf]
      %v457 = vld [vmem:[%s5 + $0xc] sm:$0xf]
      %v458 = vld [vmem:[%s5 + $0x10] sm:$0xf]
      %v459 = vld [vmem:[%s5 + $0x14] sm:$0xf]
      %v460 = vld [vmem:[%s5 + $0x18] sm:$0xf]
      %v461 = vld [vmem:[%s5 + $0x1c] sm:$0xf]
      %v462 = vld [vmem:[%s5 + $0x20] sm:$0xf]
      %v463 = vld [vmem:[%s5 + $0x24] sm:$0xf]
      %v464 = vld [vmem:[%s5 + $0x28] sm:$0xf]
      %v465 = vld [vmem:[%s5 + $0x2c] sm:$0xf]
      %v466 = vld [vmem:[%s5 + $0x30] sm:$0xf]
      %v467 = vld [vmem:[%s5 + $0x34] sm:$0xf]
      %v468 = vld [vmem:[%s5 + $0x38] sm:$0xf]
      %v469 = vld [vmem:[%s5 + $0x3c] sm:$0xf]
      %v470 = vld [vmem:[%s6] sm:$0x1]
      %v472 = vlaneseq
      %v473 = vshrl.u32 %v472, 7
      %v474 = vsub.s32 0, %v473
      %v475 = vrot.slane %v470, %v474
      %v493 = vunpack.c.l.b16 %v454
      %v494 = vunpack.c.l.b16 %v455
      %v495 = vunpack.c.l.b16 %v456
      %v496 = vunpack.c.l.b16 %v457
      %v497 = vunpack.c.l.b16 %v458
      %v498 = vunpack.c.l.b16 %v459
      %v499 = vunpack.c.l.b16 %v460
      %v500 = vunpack.c.l.b16 %v461
      %v501 = vunpack.c.l.b16 %v462
      %v502 = vunpack.c.l.b16 %v463
      %v503 = vunpack.c.l.b16 %v464
      %v504 = vunpack.c.l.b16 %v465
      %v505 = vunpack.c.l.b16 %v466
      %v506 = vunpack.c.l.b16 %v467
      %v507 = vunpack.c.l.b16 %v468
      %v508 = vunpack.c.l.b16 %v469
      %v509 = vpack.c.b16 %v494, %v493
      %v510 = vpack.c.b16 %v496, %v495
      %v511 = vpack.c.b16 %v498, %v497
      %v512 = vpack.c.b16 %v500, %v499
      %v513 = vpack.c.b16 %v502, %v501
      %v514 = vpack.c.b16 %v504, %v503
      %v515 = vpack.c.b16 %v506, %v505
      %v516 = vpack.c.b16 %v508, %v507
      %525 = vmatprep.subr.bf16.mxu0 0
      %526 = vmatpush1.bf16.msra.mxu0 %v509
      %527 = vmatprep.subr.bf16.mxu0 0
      %528 = vmatpush1.bf16.msra.mxu0 %v510
      %529 = vmatprep.subr.bf16.mxu0 0
      %530 = vmatpush1.bf16.msra.mxu0 %v511
      %531 = vmatprep.subr.bf16.mxu0 0
      %532 = vmatpush1.bf16.msra.mxu0 %v512
      %533 = vmatprep.subr.bf16.mxu0 0
      %534 = vmatpush1.bf16.msra.mxu0 %v513
      %535 = vmatprep.subr.bf16.mxu0 0
      %536 = vmatpush1.bf16.msra.mxu0 %v514
      %537 = vmatprep.subr.bf16.mxu0 0
      %538 = vmatpush1.bf16.msra.mxu0 %v515
      %539 = vmatprep.subr.bf16.mxu0 0
      %540 = vmatpush1.bf16.msra.mxu0 %v516
      %541 = vmatprep.subr.bf16.mxu0 0
      %542 = vmatpush1.bf16.msra.mxu0 0
      %543 = vmatprep.subr.bf16.mxu0 0
      %544 = vmatpush1.bf16.msra.mxu0 0
      %545 = vmatprep.subr.bf16.mxu0 0
      %546 = vmatpush1.bf16.msra.mxu0 0
      %547 = vmatprep.subr.bf16.mxu0 0
      %548 = vmatpush1.bf16.msra.mxu0 0
      %549 = vmatprep.subr.bf16.mxu0 0
      %550 = vmatpush1.bf16.msra.mxu0 0
      %551 = vmatprep.subr.bf16.mxu0 0
      %552 = vmatpush1.bf16.msra.mxu0 0
      %553 = vmatprep.subr.bf16.mxu0 0
      %554 = vmatpush1.bf16.msra.mxu0 0
      %555 = vmatprep.subr.bf16.mxu0 0
      %556 = vmatpush1.bf16.msra.mxu0 0
      %557 = vmatprep.mubr.bf16.mxu0 0
      %558 = vmatmul.mubr.bf16.gmra.mrb[0].mxu0 %v453
      %v559 = vpop.f32.mrb[0].mxu0
      %v560 = vadd.f32 %v475, %v559
      %v561 = vpop.f32.mrb[0].mxu0
      %v562 = vpop.f32.mrb[0].mxu0
      %v563 = vpop.f32.mrb[0].mxu0
      %564 = vdwg.mxu0
      %v565 = vpack.c.bf16 %v560, %v560
      %vm566 = vcmask 60416
      %567 = vst.msk [vmem:[%s273] sm:$0xf] %vm566, %v565
      %p568 = scmp.lt.s32.totalorder %s18, 3
      %s569 = scalar_select %p568, %s18, 3
      %s570 = smul.addr %s569, 4
      %s571 = scalar_lea.vmem %s7, %s570
      // Predicated region
      $region49: #{tpu_custom_call.1} parent=47 // pred_check
        %p572 = pneg %p188
      $region50: #{tpu_custom_call.1} parent=47 // pred_check_branch
        %574 = sbr.rel (%p572) target = $region52
      $region51: #{tpu_custom_call.1} parent=47 // pred_region
        _
      $region52: #{tpu_custom_call.1} parent=47 // pred_fallthru
        _
    $region48: #{tpu_custom_call.1} parent=5 // pred_fallthru
      _
    %p575 = scmp.le.s32.totalorder 2, %s13
    // Predicated region
    $region53: #{tpu_custom_call.1} parent=5 // pred_check
      %p576 = pneg %p575
    $region54: #{tpu_custom_call.1} parent=5 // pred_check_branch
      %578 = sbr.rel (%p576) target = $region56
    $region55: #{tpu_custom_call.1} parent=5 // pred_region
      %s579 = ssub.s32 %s13, 2
      // Predicated region
      $region57: #{tpu_custom_call.1} parent=55 // pred_check
        %p580 = pneg %p194
      $region58: #{tpu_custom_call.1} parent=55 // pred_check_branch
        %582 = sbr.rel (%p580) target = $region60
      $region59: #{tpu_custom_call.1} parent=55 // pred_region
        %p583 = scmp.lt.s32.totalorder %s19, 3
        %s584 = scalar_select %p583, %s19, 3
        %s585 = smul.addr %s584, 4
        %s586 = scalar_lea.vmem %s7, %s585
      $region60: #{tpu_custom_call.1} parent=55 // pred_fallthru
        _
    $region56: #{tpu_custom_call.1} parent=5 // pred_fallthru
      _
  $region6: #{tpu_custom_call.1} parent=0 // loop_footer
    %s17 = sadd.s32 1, %s13
  $region7: #{tpu_custom_call.1} parent=0 // loop_footer_branch
    %12 = sbr.rel target = $region3
  $region8: #{tpu_custom_call.1} parent=0 // loop_exit
    _

</llo_original>
